<compile_context>
chip_gen: v5e
topology: v5e:2x2
jax: 0.10.0
libtpu: 0.0.40
codegen_flags: <defaults>
</compile_context>

<pallas_src>
import jax
import jax.numpy as jnp
from jax.experimental import pallas as pl
from jax.experimental.pallas import tpu as pltpu

_LANE = 128      # lane width (last-dim tile)
_SUBLANE = 8     # sublane width (second-to-last-dim tile)


def _round_up(n, m):
    return ((n + m - 1) // m) * m


def _leaky_relu(x, slope=0.2):
    return jnp.where(x > 0, x, slope * x)


def mlp_kernel(x_ref, w1_ref, b1_ref, w2_ref, b2_ref, w3_ref, b3_ref, o_ref):
    # Layer 1: Linear (bf16 operands, f32 accumulate) + LeakyReLU in f32.
    h = jnp.dot(x_ref[...], w1_ref[...], preferred_element_type=jnp.float32)
    h = _leaky_relu(h + b1_ref[...])
    # Layer 2.
    h = jnp.dot(h.astype(w2_ref.dtype), w2_ref[...],
                preferred_element_type=jnp.float32)
    h = _leaky_relu(h + b2_ref[...])
    # Layer 3: output padded to 128 lanes -> unmasked, lane-dense store.
    o = jnp.dot(h.astype(w3_ref.dtype), w3_ref[...],
                preferred_element_type=jnp.float32)
    o_ref[...] = (o + b3_ref[...]).astype(o_ref.dtype)


def discriminator_forward(x, params, *, block_b=None):
    """x: [B, input_dim] float32.  params: dict of transposed weights/biases."""
    B, D_in = x.shape
    w1, b1 = params["w1"], params["b1"]   # [D_in, H1], [1, H1]
    w2, b2 = params["w2"], params["b2"]   # [H1, H2],  [1, H2]
    w3, b3 = params["w3"], params["b3"]   # [H2, 1],   [1, 1]
    H1, H2 = w1.shape[1], w2.shape[1]

    # Batch tile: multiple of 8 (sublane), capped at 256 rows so the per-step
    # working set (x tile + 128-wide f32 output, double-buffered) stays tiny
    # even under the 32 MiB scoped-VMEM budget on v7x.  Override via block_b.
    tb = block_b if block_b is not None else min(256, _round_up(B, _SUBLANE))
    assert tb % _SUBLANE == 0, "batch tile must be a multiple of 8"
    B_pad = _round_up(B, tb)

    xp = x if B_pad == B else jnp.pad(x, ((0, B_pad - B), (0, 0)))

    # bf16 matmul operands; biases kept in f32 (elementwise math stays f32,
    # which also avoids bf16 VPU work on v5e).
    xp = xp.astype(jnp.bfloat16)
    w1b = w1.astype(jnp.bfloat16)
    w2b = w2.astype(jnp.bfloat16)
    # Lane-dense output: zero-pad w3/b3 to 128 output columns; pad columns are
    # exact zeros so column 0 is unchanged.
    w3p = jnp.pad(w3, ((0, 0), (0, _LANE - w3.shape[1]))).astype(jnp.bfloat16)
    b3p = jnp.pad(b3, ((0, 0), (0, _LANE - b3.shape[1]))).astype(jnp.float32)
    b1f = b1.astype(jnp.float32)
    b2f = b2.astype(jnp.float32)

    grid = (B_pad // tb,)

    # Weights/biases are tiny (<~20 KB): replicate the full tensor with a
    # constant index map; they stay VMEM-resident across grid steps.
    full = lambda shape: pl.BlockSpec(shape, lambda i: (0, 0))

    flops = 2 * B_pad * (D_in * H1 + H1 * H2 + H2 * _LANE)
    bytes_accessed = (
        B_pad * D_in * 2                       # x (bf16)
        + B_pad * _LANE * 4                    # output (f32, lane-padded)
        + (w1b.size + w2b.size + w3p.size) * 2 # bf16 weights
        + (b1f.size + b2f.size + b3p.size) * 4 # f32 biases
    )

    out = pl.pallas_call(
        mlp_kernel,
        out_shape=jax.ShapeDtypeStruct((B_pad, _LANE), jnp.float32),
        grid_spec=pltpu.PrefetchScalarGridSpec(
            num_scalar_prefetch=0,
            grid=grid,
            in_specs=[
                pl.BlockSpec((tb, D_in), lambda i: (i, 0)),   # x tile
                full((D_in, H1)), full((1, H1)),
                full((H1, H2)), full((1, H2)),
                full((H2, _LANE)), full((1, _LANE)),
            ],
            out_specs=pl.BlockSpec((tb, _LANE), lambda i: (i, 0)),
        ),
        compiler_params=pltpu.CompilerParams(
            dimension_semantics=("parallel",),
            vmem_limit_bytes=32 * 1024 * 1024,
        ),
        cost_estimate=pl.CostEstimate(
            flops=flops, transcendentals=0, bytes_accessed=bytes_accessed),
    )(xp, w1b, b1f, w2b, b2f, w3p, b3p)

    # Drop pad rows and pad lanes.
    return out[:B, :1]


def init_params(key, input_dim, hidden_dims):
    """Deterministic init mimicking nn.Linear's U(-1/sqrt(fan_in), 1/sqrt(fan_in)).

    Weights are stored pre-transposed as [in, out]."""
    dims = [input_dim] + list(hidden_dims) + [1]
    params = {}
    for i in range(len(dims) - 1):
        fan_in, fan_out = dims[i], dims[i + 1]
        key, kw, kb = jax.random.split(key, 3)
        bound = 1.0 / jnp.sqrt(fan_in)
        w = jax.random.uniform(kw, (fan_in, fan_out), jnp.float32, -bound, bound)
        b = jax.random.uniform(kb, (1, fan_out), jnp.float32, -bound, bound)
        params[f"w{i + 1}"] = w
        params[f"b{i + 1}"] = b
    return params


def reference_forward(x, params):
    h = x @ params["w1"] + params["b1"]
    h = jnp.where(h > 0, h, 0.2 * h)
    h = h @ params["w2"] + params["b2"]
    h = jnp.where(h > 0, h, 0.2 * h)
    return h @ params["w3"] + params["b3"]


if __name__ == "__main__":
    input_dim = 32
    hidden_dims = [64, 32]

    key = jax.random.PRNGKey(0)
    key, kx1, kx2 = jax.random.split(key, 3)
    params = init_params(key, input_dim, hidden_dims)

    # Small batch (single grid step).
    x_small = jax.random.normal(kx1, (8, input_dim), jnp.float32)
    out_small = jax.block_until_ready(discriminator_forward(x_small, params))
    ref_small = reference_forward(x_small, params)
    assert out_small.shape == (8, 1)
    # bf16 matmul operands -> loosened tolerance vs the f32 reference.
    assert jnp.allclose(out_small, ref_small, atol=2e-2, rtol=2e-2), \
        "mismatch vs reference (small batch)"

    # Larger, non-aligned batch: exercises batch padding + multi-step grid.
    x_big = jax.random.normal(kx2, (300, input_dim), jnp.float32)
    out_big = jax.block_until_ready(discriminator_forward(x_big, params))
    ref_big = reference_forward(x_big, params)
    assert out_big.shape == (300, 1)
    assert jnp.allclose(out_big, ref_big, atol=2e-2, rtol=2e-2), \
        "mismatch vs reference (big batch)"

    print("KERNEL_OK")
</pallas_src>

<mosaic_0001>
module attributes {stable_mosaic.version = 11 : i64} {
  func.func @mlp_kernel(%arg0: i32, %arg1: memref<8x32xbf16, #tpu.memory_space<vmem>>, %arg2: memref<32x64xbf16, #tpu.memory_space<vmem>>, %arg3: memref<1x64xf32, #tpu.memory_space<vmem>>, %arg4: memref<64x32xbf16, #tpu.memory_space<vmem>>, %arg5: memref<1x32xf32, #tpu.memory_space<vmem>>, %arg6: memref<32x128xbf16, #tpu.memory_space<vmem>>, %arg7: memref<1x128xf32, #tpu.memory_space<vmem>>, %arg8: memref<8x128xf32, #tpu.memory_space<vmem>>) attributes {dimension_semantics = [#tpu.dimension_semantics<parallel>], iteration_bounds = array<i64: 1>, scalar_prefetch = 0 : i64, scratch_operands = 0 : i64, tpu.core_type = #tpu.core_type<tc>, window_params = [{transform_indices = @transform_0, window_bounds = array<i64: 8, 32>}, {pipeline_mode = #tpu.pipeline_mode<synchronous>, transform_indices = @transform_1, window_bounds = array<i64: 32, 64>}, {pipeline_mode = #tpu.pipeline_mode<synchronous>, transform_indices = @transform_2, window_bounds = array<i64: 1, 64>}, {pipeline_mode = #tpu.pipeline_mode<synchronous>, transform_indices = @transform_3, window_bounds = array<i64: 64, 32>}, {pipeline_mode = #tpu.pipeline_mode<synchronous>, transform_indices = @transform_4, window_bounds = array<i64: 1, 32>}, {pipeline_mode = #tpu.pipeline_mode<synchronous>, transform_indices = @transform_5, window_bounds = array<i64: 32, 128>}, {pipeline_mode = #tpu.pipeline_mode<synchronous>, transform_indices = @transform_6, window_bounds = array<i64: 1, 128>}, {transform_indices = @transform_7, window_bounds = array<i64: 8, 128>}]} {
    %c0 = arith.constant 0 : index
    %c0_0 = arith.constant 0 : index
    %0 = vector.load %arg1[%c0, %c0_0] : memref<8x32xbf16, #tpu.memory_space<vmem>>, vector<8x32xbf16>
    %c0_1 = arith.constant 0 : index
    %c0_2 = arith.constant 0 : index
    %1 = vector.load %arg2[%c0_1, %c0_2] : memref<32x64xbf16, #tpu.memory_space<vmem>>, vector<32x64xbf16>
    %cst = arith.constant dense<0.000000e+00> : vector<8x64xf32>
    %2 = tpu.matmul %0, %1, %cst {dimension_numbers = #tpu.dot_dimension_numbers<[1], [0], [0], [1], [0, 0, 1, 1], [], []>} : vector<8x32xbf16>, vector<32x64xbf16>, vector<8x64xf32> -> vector<8x64xf32>
    %c0_3 = arith.constant 0 : index
    %c0_4 = arith.constant 0 : index
    %3 = vector.load %arg3[%c0_3, %c0_4] : memref<1x64xf32, #tpu.memory_space<vmem>>, vector<1x64xf32>
    %4 = vector.broadcast %3 : vector<1x64xf32> to vector<8x64xf32>
    %5 = arith.addf %2, %4 : vector<8x64xf32>
    %cst_5 = arith.constant 0.000000e+00 : f32
    %6 = vector.broadcast %cst_5 : f32 to vector<8x64xf32>
    %7 = arith.cmpf ogt, %5, %6 : vector<8x64xf32>
    %cst_6 = arith.constant 2.000000e-01 : f32
    %8 = vector.broadcast %cst_6 : f32 to vector<8x64xf32>
    %9 = arith.mulf %8, %5 : vector<8x64xf32>
    %10 = arith.select %7, %5, %9 : vector<8x64xi1>, vector<8x64xf32>
    %11 = arith.truncf %10 : vector<8x64xf32> to vector<8x64xbf16>
    %c0_7 = arith.constant 0 : index
    %c0_8 = arith.constant 0 : index
    %12 = vector.load %arg4[%c0_7, %c0_8] : memref<64x32xbf16, #tpu.memory_space<vmem>>, vector<64x32xbf16>
    %cst_9 = arith.constant dense<0.000000e+00> : vector<8x32xf32>
    %13 = tpu.matmul %11, %12, %cst_9 {dimension_numbers = #tpu.dot_dimension_numbers<[1], [0], [0], [1], [0, 0, 1, 1], [], []>} : vector<8x64xbf16>, vector<64x32xbf16>, vector<8x32xf32> -> vector<8x32xf32>
    %c0_10 = arith.constant 0 : index
    %c0_11 = arith.constant 0 : index
    %14 = vector.load %arg5[%c0_10, %c0_11] : memref<1x32xf32, #tpu.memory_space<vmem>>, vector<1x32xf32>
    %15 = vector.broadcast %14 : vector<1x32xf32> to vector<8x32xf32>
    %16 = arith.addf %13, %15 : vector<8x32xf32>
    %cst_12 = arith.constant 0.000000e+00 : f32
    %17 = vector.broadcast %cst_12 : f32 to vector<8x32xf32>
    %18 = arith.cmpf ogt, %16, %17 : vector<8x32xf32>
    %cst_13 = arith.constant 2.000000e-01 : f32
    %19 = vector.broadcast %cst_13 : f32 to vector<8x32xf32>
    %20 = arith.mulf %19, %16 : vector<8x32xf32>
    %21 = arith.select %18, %16, %20 : vector<8x32xi1>, vector<8x32xf32>
    %22 = arith.truncf %21 : vector<8x32xf32> to vector<8x32xbf16>
    %c0_14 = arith.constant 0 : index
    %c0_15 = arith.constant 0 : index
    %23 = vector.load %arg6[%c0_14, %c0_15] : memref<32x128xbf16, #tpu.memory_space<vmem>>, vector<32x128xbf16>
    %cst_16 = arith.constant dense<0.000000e+00> : vector<8x128xf32>
    %24 = tpu.matmul %22, %23, %cst_16 {dimension_numbers = #tpu.dot_dimension_numbers<[1], [0], [0], [1], [0, 0, 1, 1], [], []>} : vector<8x32xbf16>, vector<32x128xbf16>, vector<8x128xf32> -> vector<8x128xf32>
    %c0_17 = arith.constant 0 : index
    %c0_18 = arith.constant 0 : index
    %25 = vector.load %arg7[%c0_17, %c0_18] : memref<1x128xf32, #tpu.memory_space<vmem>>, vector<1x128xf32>
    %26 = vector.broadcast %25 : vector<1x128xf32> to vector<8x128xf32>
    %27 = arith.addf %24, %26 : vector<8x128xf32>
    %c0_19 = arith.constant 0 : index
    %c0_20 = arith.constant 0 : index
    %28 = vector.load %arg8[%c0_19, %c0_20] : memref<8x128xf32, #tpu.memory_space<vmem>>, vector<8x128xf32>
    tpu.vector_store %arg8[%c0_19, %c0_20], %27 {strides = array<i32>} : memref<8x128xf32, #tpu.memory_space<vmem>>, vector<8x128xf32>,
    return
  }
  func.func @transform_0(%arg0: i32) -> (i32, i32) {
    %c0_i32 = arith.constant 0 : i32
    %c0_i32_0 = arith.constant 0 : i32
    return %arg0, %c0_i32 : i32, i32
  }
  func.func @transform_1(%arg0: i32) -> (i32, i32) {
    %c0_i32 = arith.constant 0 : i32
    %c0_i32_0 = arith.constant 0 : i32
    %c0_i32_1 = arith.constant 0 : i32
    return %c0_i32, %c0_i32_0 : i32, i32
  }
  func.func @transform_2(%arg0: i32) -> (i32, i32) {
    %c0_i32 = arith.constant 0 : i32
    %c0_i32_0 = arith.constant 0 : i32
    %c0_i32_1 = arith.constant 0 : i32
    return %c0_i32, %c0_i32_0 : i32, i32
  }
  func.func @transform_3(%arg0: i32) -> (i32, i32) {
    %c0_i32 = arith.constant 0 : i32
    %c0_i32_0 = arith.constant 0 : i32
    %c0_i32_1 = arith.constant 0 : i32
    return %c0_i32, %c0_i32_0 : i32, i32
  }
  func.func @transform_4(%arg0: i32) -> (i32, i32) {
    %c0_i32 = arith.constant 0 : i32
    %c0_i32_0 = arith.constant 0 : i32
    %c0_i32_1 = arith.constant 0 : i32
    return %c0_i32, %c0_i32_0 : i32, i32
  }
  func.func @transform_5(%arg0: i32) -> (i32, i32) {
    %c0_i32 = arith.constant 0 : i32
    %c0_i32_0 = arith.constant 0 : i32
    %c0_i32_1 = arith.constant 0 : i32
    return %c0_i32, %c0_i32_0 : i32, i32
  }
  func.func @transform_6(%arg0: i32) -> (i32, i32) {
    %c0_i32 = arith.constant 0 : i32
    %c0_i32_0 = arith.constant 0 : i32
    %c0_i32_1 = arith.constant 0 : i32
    return %c0_i32, %c0_i32_0 : i32, i32
  }
  func.func @transform_7(%arg0: i32) -> (i32, i32) {
    %c0_i32 = arith.constant 0 : i32
    %c0_i32_0 = arith.constant 0 : i32
    return %arg0, %c0_i32 : i32, i32
  }
}

</mosaic_0001>

<llo_original>
// kernel: tpu_custom_call.1
$region0: #{tpu_custom_call.1}
  #allocation0 [shape = 'u32[]', space=smem, size = 0x4, offset = 0x4, fixed_abs, tag = 'smem constant byte address 0x4 - core index']
  #allocation1 [shape = 'u32[72,128]{1,0:T(1,128)}', space=vmem, size = 0x9000, scoped, tag = 'internal scratch']
  %s0 = inlined_call_operand.vmem [shape: bf16[8,32], index: 0, kind: input, shape index: {}]
  %s1 = inlined_call_operand.vmem [shape: bf16[32,64], index: 1, kind: input, shape index: {}]
  %s2 = inlined_call_operand.vmem [shape: f32[1,64], index: 2, kind: input, shape index: {}]
  %s3 = inlined_call_operand.vmem [shape: bf16[64,32], index: 3, kind: input, shape index: {}]
  %s4 = inlined_call_operand.vmem [shape: f32[1,32], index: 4, kind: input, shape index: {}]
  %s5 = inlined_call_operand.vmem [shape: bf16[32,128], index: 5, kind: input, shape index: {}]
  %s6 = inlined_call_operand.vmem [shape: f32[1,128], index: 6, kind: input, shape index: {}]
  %s7 = inlined_call_operand.hbm [shape: f32[8,128], index: 7, kind: output, shape index: {}]
  %s8 = sld [smem:[#allocation0]]
  $region38: #{tpu_custom_call.1} parent=0
    _
  %s10 = ssub.s32 1, %s8
  %s11 = scalar_select 0, %s10, %s8
  $region1: #{tpu_custom_call.1} parent=0
    #allocation2 [shape = 'u8[4096]{0}', space=vmem, size = 0x1000, scoped, tag = 'output window, operand 0, single buffered']
    #allocation3 [shape = 's32[1]{0}', space=sflag, size = 0x4, scoped, tag = 'scoped memory for tpu_custom_call.1']
    %12 = vsyncpa [#allocation3], 0
    // Predicated region
    $region2: #{tpu_custom_call.1} parent=1 // pred_check
      _
    $region3: #{tpu_custom_call.1} parent=1 // pred_check_branch
      %14 = sbr.rel (0) target = $region5
    $region4: #{tpu_custom_call.1} parent=1 // pred_region
      _
    $region5: #{tpu_custom_call.1} parent=1 // pred_fallthru
      _
    // Predicated region
    $region6: #{tpu_custom_call.1} parent=1 // pred_check
      _
    $region7: #{tpu_custom_call.1} parent=1 // pred_check_branch
      %16 = sbr.rel (0) target = $region9
    $region8: #{tpu_custom_call.1} parent=1 // pred_region
      _
    $region9: #{tpu_custom_call.1} parent=1 // pred_fallthru
      _
    // Predicated region
    $region10: #{tpu_custom_call.1} parent=1 // pred_check
      _
    $region11: #{tpu_custom_call.1} parent=1 // pred_check_branch
      %18 = sbr.rel (0) target = $region13
    $region12: #{tpu_custom_call.1} parent=1 // pred_region
      _
    $region13: #{tpu_custom_call.1} parent=1 // pred_fallthru
      _
    // Predicated region
    $region14: #{tpu_custom_call.1} parent=1 // pred_check
      _
    $region15: #{tpu_custom_call.1} parent=1 // pred_check_branch
      %20 = sbr.rel (0) target = $region17
    $region16: #{tpu_custom_call.1} parent=1 // pred_region
      _
    $region17: #{tpu_custom_call.1} parent=1 // pred_fallthru
      _
    // Predicated region
    $region18: #{tpu_custom_call.1} parent=1 // pred_check
      _
    $region19: #{tpu_custom_call.1} parent=1 // pred_check_branch
      %22 = sbr.rel (0) target = $region21
    $region20: #{tpu_custom_call.1} parent=1 // pred_region
      _
    $region21: #{tpu_custom_call.1} parent=1 // pred_fallthru
      _
    // Predicated region
    $region22: #{tpu_custom_call.1} parent=1 // pred_check
      _
    $region23: #{tpu_custom_call.1} parent=1 // pred_check_branch
      %24 = sbr.rel (0) target = $region25
    $region24: #{tpu_custom_call.1} parent=1 // pred_region
      _
    $region25: #{tpu_custom_call.1} parent=1 // pred_fallthru
      _
    // Predicated region
    $region26: #{tpu_custom_call.1} parent=1 // pred_check
      _
    $region27: #{tpu_custom_call.1} parent=1 // pred_check_branch
      %26 = sbr.rel (0) target = $region29
    $region28: #{tpu_custom_call.1} parent=1 // pred_region
      _
    $region29: #{tpu_custom_call.1} parent=1 // pred_fallthru
      _
    %v28 = vld [vmem:[%s0] sm:$0xf]
    %v29 = vld [vmem:[%s1] sm:$0xf]
    %v30 = vld [vmem:[%s1 + $0x4] sm:$0xf]
    %v31 = vld [vmem:[%s1 + $0x8] sm:$0xf]
    %v32 = vld [vmem:[%s1 + $0xc] sm:$0xf]
    %v33 = vld [vmem:[%s2] sm:$0x1]
    %v35 = vperm.slane %v33, 0
    %v41 = vunpack.c.l.b16 %v29
    %v42 = vunpack.c.l.b16 %v30
    %v43 = vunpack.c.l.b16 %v31
    %v44 = vunpack.c.l.b16 %v32
    %v45 = vpack.c.b16 %v42, %v41
    %v46 = vpack.c.b16 %v44, %v43
    %vm49 = vcmask 261120
    %v51 = vsel %vm49, %v28, 0
    %53 = vmatpush.bf16.msra.mxu0 0
    %54 = vmatpush.bf16.msra.mxu0 0
    %55 = vmatpush.bf16.msra.mxu0 0
    %56 = vmatpush.bf16.msra.mxu0 0
    %57 = vmatpush.bf16.msra.mxu0 0
    %58 = vmatpush.bf16.msra.mxu0 0
    %59 = vmatpush.bf16.msra.mxu0 %v46
    %60 = vmatpush.bf16.msra.mxu0 %v45
    %61 = vmatmul.bf16.gmra.mxu0 %v51
    %v62 = vpop.f32.mrf.mxu0
    %v63 = vadd.f32 %v35, %v62
    %v64 = vpop.f32.mrf.mxu0
    %65 = vdwg.mxu0
    %vm66 = vcmp.gt.f32.partialorder %v63, 0.0
    %v67 = vmul.f32 %v63, 0.2
    %v68 = vsel %vm66, %v63, %v67
    %v69 = vpack.c.bf16 %v68, %v68
    %v70 = vld [vmem:[%s3] sm:$0xf]
    %v71 = vld [vmem:[%s3 + $0x4] sm:$0xf]
    %v72 = vld [vmem:[%s3 + $0x8] sm:$0xf]
    %v73 = vld [vmem:[%s3 + $0xc] sm:$0xf]
    %v74 = vld [vmem:[%s3 + $0x10] sm:$0xf]
    %v75 = vld [vmem:[%s3 + $0x14] sm:$0xf]
    %v76 = vld [vmem:[%s3 + $0x18] sm:$0xf]
    %v77 = vld [vmem:[%s3 + $0x1c] sm:$0xf]
    %v78 = vld [vmem:[%s4] sm:$0x1]
    %v80 = vperm.slane %v78, 0
    %v90 = vunpack.c.l.b16 %v70
    %v91 = vunpack.c.l.b16 %v71
    %v92 = vunpack.c.l.b16 %v72
    %v93 = vunpack.c.l.b16 %v73
    %v94 = vunpack.c.l.b16 %v74
    %v95 = vunpack.c.l.b16 %v75
    %v96 = vunpack.c.l.b16 %v76
    %v97 = vunpack.c.l.b16 %v77
    %v98 = vpack.c.b16 %v91, %v90
    %v99 = vpack.c.b16 %v93, %v92
    %v100 = vpack.c.b16 %v95, %v94
    %v101 = vpack.c.b16 %v97, %v96
    %vm106 = vcmask 523264
    %v108 = vsel %vm106, %v69, 0
    %110 = vmatpush.bf16.msra.mxu0 0
    %111 = vmatpush.bf16.msra.mxu0 0
    %112 = vmatpush.bf16.msra.mxu0 0
    %113 = vmatpush.bf16.msra.mxu0 0
    %114 = vmatpush.bf16.msra.mxu0 %v101
    %115 = vmatpush.bf16.msra.mxu0 %v100
    %116 = vmatpush.bf16.msra.mxu0 %v99
    %117 = vmatpush.bf16.msra.mxu0 %v98
    %118 = vmatmul.bf16.gmra.mxu0 %v108
    %v119 = vpop.f32.mrf.mxu0
    %v120 = vadd.f32 %v80, %v119
    %v121 = vpop.f32.mrf.mxu0
    %122 = vdwg.mxu0
    %vm123 = vcmp.gt.f32.partialorder %v120, 0.0
    %v124 = vmul.f32 %v120, 0.2
    %v125 = vsel %vm123, %v120, %v124
    %v126 = vpack.c.bf16 %v125, %v125
    %v127 = vld [vmem:[%s5] sm:$0xf]
    %v128 = vld [vmem:[%s5 + $0x4] sm:$0xf]
    %v129 = vld [vmem:[%s5 + $0x8] sm:$0xf]
    %v130 = vld [vmem:[%s5 + $0xc] sm:$0xf]
    %v131 = vld [vmem:[%s6] sm:$0x1]
    %v133 = vperm.slane %v131, 0
    %v139 = vunpack.c.l.b16 %v127
    %v140 = vunpack.c.l.b16 %v128
    %v141 = vunpack.c.l.b16 %v129
    %v142 = vunpack.c.l.b16 %v130
    %v143 = vpack.c.b16 %v140, %v139
    %v144 = vpack.c.b16 %v142, %v141
    %v148 = vsel %vm49, %v126, 0
    %150 = vmatpush.bf16.msra.mxu0 0
    %151 = vmatpush.bf16.msra.mxu0 0
    %152 = vmatpush.bf16.msra.mxu0 0
    %153 = vmatpush.bf16.msra.mxu0 0
    %154 = vmatpush.bf16.msra.mxu0 0
    %155 = vmatpush.bf16.msra.mxu0 0
    %156 = vmatpush.bf16.msra.mxu0 %v144
    %157 = vmatpush.bf16.msra.mxu0 %v143
    %158 = vmatmul.bf16.gmra.mxu0 %v148
    %v159 = vpop.f32.mrf.mxu0
    %v160 = vadd.f32 %v133, %v159
    %v161 = vpop.f32.mrf.mxu0
    %162 = vdwg.mxu0
    %163 = vst [vmem:[#allocation2] sm:$0xff] %v160
    // Predicated region
    $region30: #{tpu_custom_call.1} parent=1 // pred_check
      _
    $region31: #{tpu_custom_call.1} parent=1 // pred_check_branch
      %165 = sbr.rel (0) target = $region33
    $region32: #{tpu_custom_call.1} parent=1 // pred_region
      %167 = vsyncadd [#allocation3], 0
      %s169 = sshll.u32 [#allocation2], 4
      %s170 = int_to_ptr.vmem [resolvable:$true] %s169
      %s171 = sshll.u32 %s7, 4
      %s172 = int_to_ptr.hbm [resolvable:$true] %s171
      %174 = dma.vmem_to_hbm [thread:$0]  %s170, 128, %s172, [#allocation3]
    $region33: #{tpu_custom_call.1} parent=1 // pred_fallthru
      _
    // Predicated region
    $region34: #{tpu_custom_call.1} parent=1 // pred_check
      _
    $region35: #{tpu_custom_call.1} parent=1 // pred_check_branch
      %176 = sbr.rel (0) target = $region37
    $region36: #{tpu_custom_call.1} parent=1 // pred_region
      %178 = dma.done [#allocation3], 128
    $region37: #{tpu_custom_call.1} parent=1 // pred_fallthru
      _
    %179 = vsyncpa [#allocation3], 1

</llo_original>
